<compile_context>
chip_gen: v7x
topology: tpu7x:2x2x1
jax: 0.10.0
libtpu: 0.0.40
codegen_flags: <defaults>
</compile_context>

<pallas_src>
import jax
import jax.numpy as jnp
from jax.experimental import pallas as pl
from jax.experimental.pallas import tpu as pltpu

KSIZE = 4                      # every deconv uses a 4x4 kernel
BN_EPS = 1e-5
LANE = 128


def _round_up(x, m):
    return (x + m - 1) // m * m


def _vmem_physical_bytes():
    try:
        info = pltpu.get_tpu_info()
        cap = int(getattr(info, "vmem_capacity_bytes", 0) or 0)
        if cap > 0:
            return cap
    except Exception:
        pass
    return 64 * 1024 * 1024          # conservative default (v7x per-core VMEM)


_VMEM_PHYS = _vmem_physical_bytes()
VMEM_LIMIT = min(_VMEM_PHYS * 3 // 4, 100 * 1024 * 1024)   # scoped-vmem request
TILE_BUDGET = VMEM_LIMIT * 3 // 4                          # what tiles may use


# ----------------------------------------------------------------------------
# Tile selection (generation-aware via TILE_BUDGET)
# ----------------------------------------------------------------------------
def _pick_tile_n(C, cap):
    if C <= LANE or C % LANE:
        return C
    tn = min(cap, C)
    tn -= tn % LANE
    while C % tn:
        tn -= LANE
    return tn


def _pick_mm_tiles(M, Kd, C):
    tn = _pick_tile_n(C, 512)
    tm = min(512, _round_up(M, 16))            # 16-row multiples (bf16 packing)
    # Resident VMEM per grid step:
    #   f32 acc + 2x bf16 out block + tiny stats + double-buffered bf16 K slabs.
    fixed = tm * tn * 4 + 2 * tm * tn * 2 + 4 * 2 * tn * 4
    rem = max(TILE_BUDGET - fixed, 0)
    tk_cap = rem // (2 * 2 * (tm + tn))        # 2 bufs * 2 bytes * (x row + w col)
    tk_cap = max(tk_cap - tk_cap % LANE, LANE)
    tk = min(_round_up(Kd, LANE), tk_cap)      # collapse K grid axis when it fits
    return tm, tn, tk


# ----------------------------------------------------------------------------
# Pallas kernel 1: grouped matmul (parity, M, N, K grid) + fused BN statistics
# ----------------------------------------------------------------------------
def _mm_bn_kernel(x_ref, w_ref, o_ref, sum_ref, sq_ref, acc_ref):
    k = pl.program_id(3)
    nk = pl.num_programs(3)

    @pl.when(k == 0)
    def _():
        acc_ref[...] = jnp.zeros_like(acc_ref)

    acc_ref[...] += jnp.dot(x_ref[...], w_ref[...],
                            preferred_element_type=jnp.float32)

    @pl.when(k == nk - 1)
    def _():
        y = acc_ref[...]
        o_ref[...] = y.astype(o_ref.dtype)
        # per-(parity, M-tile, C-tile) partials -> reduced in the wrapper;
        # written exactly once per block, so M/N grid axes stay 'parallel'.
        sum_ref[...] = jnp.sum(y, axis=0, keepdims=True)
        sq_ref[...] = jnp.sum(y * y, axis=0, keepdims=True)


# ----------------------------------------------------------------------------
# Pallas kernel 2: grouped matmul + bias + tanh (final layer)
# ----------------------------------------------------------------------------
def _mm_bias_tanh_kernel(x_ref, w_ref, b_ref, o_ref, acc_ref):
    k = pl.program_id(3)
    nk = pl.num_programs(3)

    @pl.when(k == 0)
    def _():
        acc_ref[...] = jnp.zeros_like(acc_ref)

    acc_ref[...] += jnp.dot(x_ref[...], w_ref[...],
                            preferred_element_type=jnp.float32)

    @pl.when(k == nk - 1)
    def _():
        o_ref[...] = jnp.tanh(acc_ref[...] + b_ref[...]).astype(o_ref.dtype)


def pallas_grouped_matmul(patches, wmats, bias=None, with_stats=False):
    """Batched (per sub-pixel parity) MXU matmul.

    patches: (P, M, Kd)  -> bf16; wmats: (P, Kd, C) -> bf16 (C multiple of 128).
    Returns y (P, M, C) bf16; with_stats also returns per-parity f32 channel
    sums / sums-of-squares of shape (P, C) (exact: padded rows are zero).
    """
    P, M, Kd = patches.shape
    C = wmats.shape[2]

    tm, tn, tk = _pick_mm_tiles(M, Kd, C)
    Mp = _round_up(M, tm)
    Kp = _round_up(Kd, tk)

    # zero padding is exact: padded rows/columns contribute nothing
    patches = jnp.pad(patches.astype(jnp.bfloat16),
                      ((0, 0), (0, Mp - M), (0, Kp - Kd)))
    wmats = jnp.pad(wmats.astype(jnp.bfloat16),
                    ((0, 0), (0, Kp - Kd), (0, 0)))

    nm, nn, nk = Mp // tm, C // tn, Kp // tk
    grid = (P, nm, nn, nk)

    x_spec = pl.BlockSpec((None, tm, tk), lambda p, i, j, k: (p, i, k))
    w_spec = pl.BlockSpec((None, tk, tn), lambda p, i, j, k: (p, k, j))
    y_spec = pl.BlockSpec((None, tm, tn), lambda p, i, j, k: (p, i, j))
    y_shape = jax.ShapeDtypeStruct((P, Mp, C), jnp.bfloat16)

    in_specs = [x_spec, w_spec]
    args = [patches, wmats]

    if with_stats:
        kernel = _mm_bn_kernel
        stat_shape = jax.ShapeDtypeStruct((P * nm, 1, C), jnp.float32)
        stat_spec = pl.BlockSpec((None, 1, tn),
                                 lambda p, i, j, k: (p * nm + i, 0, j))
        out_shape = (y_shape, stat_shape, stat_shape)
        out_specs = (y_spec, stat_spec, stat_spec)
    else:
        kernel = _mm_bias_tanh_kernel
        in_specs.append(pl.BlockSpec((1, tn), lambda p, i, j, k: (0, j)))
        args.append(bias.reshape(1, C).astype(jnp.float32))
        out_shape = y_shape
        out_specs = y_spec

    outs = pl.pallas_call(
        kernel,
        out_shape=out_shape,
        grid_spec=pltpu.PrefetchScalarGridSpec(
            num_scalar_prefetch=0,
            grid=grid,
            in_specs=in_specs,
            out_specs=out_specs,
            scratch_shapes=[pltpu.VMEM((tm, tn), jnp.float32)],
        ),
        compiler_params=pltpu.CompilerParams(
            dimension_semantics=("parallel", "parallel", "parallel", "arbitrary"),
            vmem_limit_bytes=VMEM_LIMIT),
    )(*args)

    if with_stats:
        y, s, sq = outs
        s = s.reshape(P, nm, C).sum(axis=1)
        sq = sq.reshape(P, nm, C).sum(axis=1)
        return y[:, :M, :], s, sq
    return outs[:, :M, :]


# ----------------------------------------------------------------------------
# Pallas kernel 3: fused BatchNorm affine + ReLU (bf16 IO, f32 math)
# ----------------------------------------------------------------------------
def _affine_relu_kernel(y_ref, scale_ref, shift_ref, o_ref):
    y = y_ref[...].astype(jnp.float32)                    # f32 VPU math (v5e-safe)
    o_ref[...] = jnp.maximum(y * scale_ref[...] + shift_ref[...],
                             0.0).astype(o_ref.dtype)


def pallas_affine_relu(y, scale, shift):
    """y: (M, C) bf16; scale/shift: (1, C) f32 -> relu(y*scale+shift) as bf16."""
    M, C = y.shape
    tn = _pick_tile_n(C, 1024)
    tm_cap = max(TILE_BUDGET // (8 * tn), 16)   # 2 bufs * (bf16 in + bf16 out)
    tm = min(2048, _round_up(M, 16), max(tm_cap - tm_cap % 16, 16))
    Mp = _round_up(M, tm)
    yp = jnp.pad(y.astype(jnp.bfloat16), ((0, Mp - M), (0, 0)))
    out = pl.pallas_call(
        _affine_relu_kernel,
        out_shape=jax.ShapeDtypeStruct((Mp, C), jnp.bfloat16),
        grid_spec=pltpu.PrefetchScalarGridSpec(
            num_scalar_prefetch=0,
            grid=(Mp // tm, C // tn),
            in_specs=[
                pl.BlockSpec((tm, tn), lambda i, j: (i, j)),
                pl.BlockSpec((1, tn), lambda i, j: (0, j)),
                pl.BlockSpec((1, tn), lambda i, j: (0, j)),
            ],
            out_specs=pl.BlockSpec((tm, tn), lambda i, j: (i, j)),
        ),
        compiler_params=pltpu.CompilerParams(
            dimension_semantics=("parallel", "parallel"),
            vmem_limit_bytes=VMEM_LIMIT),
    )(yp, scale.astype(jnp.float32), shift.astype(jnp.float32))
    return out[:M]


# ----------------------------------------------------------------------------
# BatchNorm helpers (PyTorch training-mode batch stats, gamma/beta affine)
# ----------------------------------------------------------------------------
def _bn_scale_shift(sums, sqs, count, gamma, beta):
    mean = sums / count
    var = jnp.maximum(sqs / count - mean * mean, 0.0)   # biased var, clamped
    scale = gamma * jax.lax.rsqrt(var + BN_EPS)
    shift = beta - mean * scale
    return scale, shift


# ----------------------------------------------------------------------------
# Sub-pixel decomposition of a stride-2, pad-1, 4x4 ConvTranspose2d (NHWC, bf16)
# ----------------------------------------------------------------------------
def _subpixel_patches(x, W):
    """x: (N,H,Wd,Cin) NHWC; W: ConvTranspose2d weight (Cin,Cout,4,4).
    Returns patches (4, N*H*Wd, Cin*4) bf16, wmats (4, Cin*4, Cout) f32;
    parity index p = ah*2 + aw (oh = 2h + ah, ow = 2w + aw)."""
    x = x.astype(jnp.bfloat16)                            # patches built in bf16
    N, H, Wd, Cin = x.shape
    Cout = W.shape[1]
    xp = jnp.pad(x, ((0, 0), (1, 1), (1, 1), (0, 0)))
    plist, wlist = [], []
    for ah in (0, 1):
        for aw in (0, 1):
            taps = [xp[:, ah + dh:ah + dh + H, aw + dw:aw + dw + Wd, :]
                    for dh in (0, 1) for dw in (0, 1)]
            pat = jnp.stack(taps, axis=-1)                # (N,H,Wd,Cin,4) bf16
            plist.append(pat.reshape(N * H * Wd, Cin * 4))
            wsub = W[:, :, 3 - ah::-2, 3 - aw::-2]        # (Cin,Cout,2,2); k = 3-a-2d
            wlist.append(jnp.transpose(wsub, (0, 2, 3, 1)).reshape(Cin * 4, Cout))
    return jnp.stack(plist), jnp.stack(wlist)


def _assemble_parities(y, N, H, Wd, C):
    # y: (4, N*H*Wd, C) with parity index ah*2+aw -> NHWC (N, 2H, 2W, C)
    y = y.reshape(2, 2, N, H, Wd, C)
    y = jnp.transpose(y, (2, 3, 0, 4, 1, 5))
    return y.reshape(N, 2 * H, 2 * Wd, C)


def _pad_weight(W, cin_pad, cout_pad):
    Cin, Cout = W.shape[0], W.shape[1]
    return jnp.pad(W, ((0, cin_pad - Cin), (0, cout_pad - Cout), (0, 0), (0, 0)))


# ----------------------------------------------------------------------------
# Layer wrappers (activations kept NHWC bf16, channel dims lane-padded to 128)
# ----------------------------------------------------------------------------
def deconv1_bn_relu(z, W, gamma, beta):
    # deconv1: stride=1, pad=0, 1x1 input -> pure matmul producing a 4x4 map.
    # Conv bias skipped (cancelled exactly by the following BatchNorm).
    N, Cin = z.shape
    Cout = W.shape[1]
    Cp = _round_up(Cout, LANE)
    Wp = _pad_weight(W, Cin, Cp)
    wmat = jnp.transpose(Wp, (0, 2, 3, 1)).reshape(Cin, KSIZE * KSIZE * Cp)
    y, s, sq = pallas_grouped_matmul(z[None].astype(jnp.bfloat16), wmat[None],
                                     with_stats=True)
    sums = s.reshape(KSIZE * KSIZE, Cp).sum(axis=0)
    sqs = sq.reshape(KSIZE * KSIZE, Cp).sum(axis=0)
    count = jnp.float32(N * KSIZE * KSIZE)
    gamma_p = jnp.pad(gamma, (0, Cp - Cout), constant_values=1.0)
    beta_p = jnp.pad(beta, (0, Cp - Cout))
    scale, shift = _bn_scale_shift(sums, sqs, count, gamma_p, beta_p)
    scale_cols = jnp.tile(scale.reshape(1, Cp), (1, KSIZE * KSIZE))
    shift_cols = jnp.tile(shift.reshape(1, Cp), (1, KSIZE * KSIZE))
    y = pallas_affine_relu(y.reshape(N, KSIZE * KSIZE * Cp), scale_cols, shift_cols)
    return y.reshape(N, KSIZE, KSIZE, Cp)                 # NHWC, channel-padded


def deconv_s2_bn_relu(x, W, gamma, beta):
    # stride=2, pad=1 ConvTranspose2d + BatchNorm(batch stats) + ReLU
    # (conv bias cancelled by BN); x is NHWC bf16 with channel-padded Cin.
    N, H, Wd, Cin_pad = x.shape
    Cout = W.shape[1]
    Cp = _round_up(Cout, LANE)
    Wp = _pad_weight(W, Cin_pad, Cp)
    patches, wmats = _subpixel_patches(x, Wp)
    y, s, sq = pallas_grouped_matmul(patches, wmats, with_stats=True)
    M = N * H * Wd
    count = jnp.float32(4 * M)                    # N * 2H * 2W elems per channel
    gamma_p = jnp.pad(gamma, (0, Cp - Cout), constant_values=1.0)
    beta_p = jnp.pad(beta, (0, Cp - Cout))
    scale, shift = _bn_scale_shift(s.sum(axis=0), sq.sum(axis=0), count,
                                   gamma_p, beta_p)
    y = pallas_affine_relu(y.reshape(4 * M, Cp),
                           scale.reshape(1, Cp), shift.reshape(1, Cp))
    return _assemble_parities(y.reshape(4, M, Cp), N, H, Wd, Cp)


def deconv_s2_tanh(x, W, b):
    # final layer: stride=2, pad=1, bias + tanh; Cout lane-padded to exactly 128
    # inside the kernel (bf16 store), sliced back to the real channels after.
    N, H, Wd, Cin_pad = x.shape
    Cout = W.shape[1]
    Cp = _round_up(Cout, LANE)
    Wp = _pad_weight(W, Cin_pad, Cp)
    patches, wmats = _subpixel_patches(x, Wp)
    bp = jnp.pad(b, (0, Cp - Cout)).reshape(1, Cp)
    y = pallas_grouped_matmul(patches, wmats, bias=bp, with_stats=False)
    M = N * H * Wd
    out = _assemble_parities(y.reshape(4, M, Cp), N, H, Wd, Cp)
    return out[..., :Cout]


# ----------------------------------------------------------------------------
# Generator: parameters + forward
# ----------------------------------------------------------------------------
def init_generator_params(key, d=16, z_dim=100, std=0.02):
    # mirrors generator.__init__ shapes + weight_init(mean=0.0, std=0.02)
    dims = [z_dim, d * 8, d * 4, d * 2, d, 3]
    keys = jax.random.split(key, 5)
    params = {}
    for i in range(5):
        cin, cout = dims[i], dims[i + 1]
        params[f"W{i+1}"] = std * jax.random.normal(
            keys[i], (cin, cout, KSIZE, KSIZE), dtype=jnp.float32)
        params[f"b{i+1}"] = jnp.zeros((cout,), jnp.float32)
        if i < 4:  # BatchNorm2d defaults: weight=1, bias=0
            params[f"gamma{i+1}"] = jnp.ones((cout,), jnp.float32)
            params[f"beta{i+1}"] = jnp.zeros((cout,), jnp.float32)
    return params


def generator_forward(params, z):
    # z: (N, 100, 1, 1) NCHW (PyTorch layout); internal activations are NHWC
    # bf16 with channel counts lane-padded to multiples of 128.
    N = z.shape[0]
    x = deconv1_bn_relu(z.reshape(N, -1), params["W1"],
                        params["gamma1"], params["beta1"])                      # 4x4
    x = deconv_s2_bn_relu(x, params["W2"], params["gamma2"], params["beta2"])   # 8x8
    x = deconv_s2_bn_relu(x, params["W3"], params["gamma3"], params["beta3"])   # 16x16
    x = deconv_s2_bn_relu(x, params["W4"], params["gamma4"], params["beta4"])   # 32x32
    x = deconv_s2_tanh(x, params["W5"], params["b5"])                           # 64x64
    return jnp.transpose(x, (0, 3, 1, 2)).astype(jnp.float32)       # NCHW boundary


# ----------------------------------------------------------------------------
# Reference for the sub-pixel decomposition self-check
# ----------------------------------------------------------------------------
def _ref_deconv_s2_tanh(x_nhwc, W, b):
    """tanh(ConvTranspose2d(stride=2, padding=1, k=4)(x) + b) via an
    lhs-dilated convolution with the spatially-flipped, IO-swapped kernel."""
    x = jnp.transpose(x_nhwc.astype(jnp.float32), (0, 3, 1, 2))
    w = jnp.transpose(W[:, :, ::-1, ::-1], (1, 0, 2, 3))            # (Cout,Cin,4,4)
    y = jax.lax.conv_general_dilated(
        x, w, window_strides=(1, 1), padding=((2, 2), (2, 2)),
        lhs_dilation=(2, 2), dimension_numbers=("NCHW", "OIHW", "NCHW"),
        precision=jax.lax.Precision.HIGHEST)
    y = jnp.tanh(y + b.reshape(1, -1, 1, 1))
    return jnp.transpose(y, (0, 2, 3, 1))


if __name__ == "__main__":
    d = 16          # scaled-down from the default d=128 for a small test
    batch = 2
    key = jax.random.PRNGKey(0)
    pkey, zkey, k1, k2, k3 = jax.random.split(key, 5)

    # --- numerical self-check of the sub-pixel ConvTranspose2d path -----------
    xc = jax.random.normal(k1, (2, 8, 8, 128), dtype=jnp.float32).astype(jnp.bfloat16)
    Wc = 0.02 * jax.random.normal(k2, (128, 3, KSIZE, KSIZE), dtype=jnp.float32)
    bc = 0.1 * jax.random.normal(k3, (3,), dtype=jnp.float32)
    got = jax.block_until_ready(jax.jit(deconv_s2_tanh)(xc, Wc, bc)).astype(jnp.float32)
    want = _ref_deconv_s2_tanh(xc, Wc, bc)
    assert got.shape == want.shape, (got.shape, want.shape)
    err = float(jnp.max(jnp.abs(got - want)))
    assert err < 3e-2, f"sub-pixel deconv mismatch: max abs err {err}"

    # --- full generator forward ------------------------------------------------
    params = init_generator_params(pkey, d=d)
    z = jax.random.normal(zkey, (batch, 100, 1, 1), dtype=jnp.float32)

    fwd = jax.jit(generator_forward)
    out = jax.block_until_ready(fwd(params, z))

    assert out.shape == (batch, 3, 64, 64), out.shape
    assert bool(jnp.all(jnp.isfinite(out)))
    assert bool(jnp.all(jnp.abs(out) <= 1.0))  # tanh range
    print("KERNEL_OK")
</pallas_src>

<mosaic_0001>
module attributes {stable_mosaic.version = 11 : i64} {
  func.func @_mm_bias_tanh_kernel(%arg0: i32, %arg1: i32, %arg2: i32, %arg3: i32, %arg4: memref<1x128x512xbf16, #tpu.memory_space<vmem>>, %arg5: memref<1x512x128xbf16, #tpu.memory_space<vmem>>, %arg6: memref<1x128xf32, #tpu.memory_space<vmem>>, %arg7: memref<1x128x128xbf16, #tpu.memory_space<vmem>>, %arg8: memref<128x128xf32, #tpu.memory_space<vmem>>) attributes {dimension_semantics = [#tpu.dimension_semantics<parallel>, #tpu.dimension_semantics<parallel>, #tpu.dimension_semantics<parallel>, #tpu.dimension_semantics<arbitrary>], iteration_bounds = array<i64: 4, 1, 1, 1>, scalar_prefetch = 0 : i64, scratch_operands = 1 : i64, tpu.core_type = #tpu.core_type<tc>, window_params = [{transform_indices = @transform_0, window_bounds = array<i64: 1, 128, 512>}, {transform_indices = @transform_1, window_bounds = array<i64: 1, 512, 128>}, {transform_indices = @transform_2, window_bounds = array<i64: 1, 128>}, {transform_indices = @transform_3, window_bounds = array<i64: 1, 128, 128>}]} {
    %c0_i32 = arith.constant 0 : i32
    %0 = arith.cmpi eq, %arg3, %c0_i32 : i32
    %1 = arith.extui %0 : i1 to i32
    %c0_i32_0 = arith.constant 0 : i32
    %2 = arith.cmpi ne, %1, %c0_i32_0 : i32
    scf.if %2 {
      %cst_12 = arith.constant 0.000000e+00 : f32
      %14 = vector.broadcast %cst_12 : f32 to vector<128x128xf32>
      %c0_13 = arith.constant 0 : index
      %c0_14 = arith.constant 0 : index
      %15 = vector.load %arg8[%c0_13, %c0_14] : memref<128x128xf32, #tpu.memory_space<vmem>>, vector<128x128xf32>
      tpu.vector_store %arg8[%c0_13, %c0_14], %14 {strides = array<i32>} : memref<128x128xf32, #tpu.memory_space<vmem>>, vector<128x128xf32>,
    } else {
    }
    %c0 = arith.constant 0 : index
    %c0_1 = arith.constant 0 : index
    %3 = vector.load %arg8[%c0, %c0_1] : memref<128x128xf32, #tpu.memory_space<vmem>>, vector<128x128xf32>
    %c0_2 = arith.constant 0 : index
    %c0_3 = arith.constant 0 : index
    %c0_4 = arith.constant 0 : index
    %4 = vector.load %arg4[%c0_2, %c0_3, %c0_4] : memref<1x128x512xbf16, #tpu.memory_space<vmem>>, vector<1x128x512xbf16>
    %5 = vector.shape_cast %4 : vector<1x128x512xbf16> to vector<128x512xbf16>
    %c0_5 = arith.constant 0 : index
    %c0_6 = arith.constant 0 : index
    %c0_7 = arith.constant 0 : index
    %6 = vector.load %arg5[%c0_5, %c0_6, %c0_7] : memref<1x512x128xbf16, #tpu.memory_space<vmem>>, vector<1x512x128xbf16>
    %7 = vector.shape_cast %6 : vector<1x512x128xbf16> to vector<512x128xbf16>
    %cst = arith.constant dense<0.000000e+00> : vector<128x128xf32>
    %8 = tpu.matmul %5, %7, %cst {dimension_numbers = #tpu.dot_dimension_numbers<[1], [0], [0], [1], [0, 0, 1, 1], [], []>} : vector<128x512xbf16>, vector<512x128xbf16>, vector<128x128xf32> -> vector<128x128xf32>
    %9 = arith.addf %3, %8 : vector<128x128xf32>
    %c0_8 = arith.constant 0 : index
    %c0_9 = arith.constant 0 : index
    %10 = vector.load %arg8[%c0_8, %c0_9] : memref<128x128xf32, #tpu.memory_space<vmem>>, vector<128x128xf32>
    tpu.vector_store %arg8[%c0_8, %c0_9], %9 {strides = array<i32>} : memref<128x128xf32, #tpu.memory_space<vmem>>, vector<128x128xf32>,
    %c0_i32_10 = arith.constant 0 : i32
    %11 = arith.cmpi eq, %arg3, %c0_i32_10 : i32
    %12 = arith.extui %11 : i1 to i32
    %c0_i32_11 = arith.constant 0 : i32
    %13 = arith.cmpi ne, %12, %c0_i32_11 : i32
    scf.if %13 {
      %c0_12 = arith.constant 0 : index
      %c0_13 = arith.constant 0 : index
      %14 = vector.load %arg8[%c0_12, %c0_13] : memref<128x128xf32, #tpu.memory_space<vmem>>, vector<128x128xf32>
      %c0_14 = arith.constant 0 : index
      %c0_15 = arith.constant 0 : index
      %15 = vector.load %arg6[%c0_14, %c0_15] : memref<1x128xf32, #tpu.memory_space<vmem>>, vector<1x128xf32>
      %16 = vector.broadcast %15 : vector<1x128xf32> to vector<128x128xf32>
      %17 = arith.addf %14, %16 : vector<128x128xf32>
      %18 = math.tanh %17 : vector<128x128xf32>
      %19 = arith.truncf %18 : vector<128x128xf32> to vector<128x128xbf16>
      %c0_16 = arith.constant 0 : index
      %c0_17 = arith.constant 0 : index
      %c0_18 = arith.constant 0 : index
      %20 = vector.load %arg7[%c0_16, %c0_17, %c0_18] : memref<1x128x128xbf16, #tpu.memory_space<vmem>>, vector<1x128x128xbf16>
      %21 = vector.shape_cast %20 : vector<1x128x128xbf16> to vector<128x128xbf16>
      %22 = vector.shape_cast %19 : vector<128x128xbf16> to vector<1x128x128xbf16>
      tpu.vector_store %arg7[%c0_16, %c0_17, %c0_18], %22 {strides = array<i32>} : memref<1x128x128xbf16, #tpu.memory_space<vmem>>, vector<1x128x128xbf16>,
    } else {
    }
    return
  }
  func.func @transform_0(%arg0: i32, %arg1: i32, %arg2: i32, %arg3: i32) -> (i32, i32, i32) {
    %c0_i32 = arith.constant 0 : i32
    return %arg0, %arg1, %arg3 : i32, i32, i32
  }
  func.func @transform_1(%arg0: i32, %arg1: i32, %arg2: i32, %arg3: i32) -> (i32, i32, i32) {
    %c0_i32 = arith.constant 0 : i32
    return %arg0, %arg3, %arg2 : i32, i32, i32
  }
  func.func @transform_2(%arg0: i32, %arg1: i32, %arg2: i32, %arg3: i32) -> (i32, i32) {
    %c0_i32 = arith.constant 0 : i32
    %c0_i32_0 = arith.constant 0 : i32
    return %c0_i32, %arg2 : i32, i32
  }
  func.func @transform_3(%arg0: i32, %arg1: i32, %arg2: i32, %arg3: i32) -> (i32, i32, i32) {
    %c0_i32 = arith.constant 0 : i32
    return %arg0, %arg1, %arg2 : i32, i32, i32
  }
}

</mosaic_0001>

<llo_original>
// kernel: deconv_s2_tanh.1
$region0: #{deconv_s2_tanh.1}
  #allocation0 [shape = 'u32[]', space=smem, size = 0x4, offset = 0x4, fixed_abs, tag = 'smem constant byte address 0x4 - core index']
  #allocation1 [shape = 'u32[144,128]{1,0:T(1,128)}', space=vmem, size = 0x12000, scoped, tag = 'internal scratch']
  #allocation2 [shape = 'f32[128,128]{1,0:T(8,128)}', space=vmem, size = 0x10000, scoped, tag = 'scratch operand']
  %s0 = inlined_call_operand.vmem [shape: bf16[4,128,512], index: 0, kind: input, shape index: {}]
  %s1 = inlined_call_operand.vmem [shape: bf16[4,512,128], index: 1, kind: input, shape index: {}]
  %s2 = inlined_call_operand.vmem [shape: f32[1,128], index: 2, kind: input, shape index: {}]
  %s3 = inlined_call_operand.vmem [shape: bf16[4,128,128], index: 3, kind: output, shape index: {}]
  %s4 = sld [smem:[#allocation0]]
  $region53: #{deconv_s2_tanh.1} parent=0
    _
  %s6 = ssub.s32 1, %s4
  %s7 = scalar_select 0, %s6, %s4
  loop: start=0, step=1, limit=6
  $region2: #{deconv_s2_tanh.1} parent=0 // loop_pre_header
    _
  $region3: #{deconv_s2_tanh.1} parent=0 // loop_header
    %s9 = sphi 0, %s13
    %p10 = scmp.ge.s32.totalorder %s9, 6
    %s16 = sphi 0, %s42
    %s17 = sphi 0, %s38
    %s18 = sphi 0, %s34
    %s19 = sphi 0, %s30
    %s20 = sphi 0, %s16
    %s21 = sphi 0, %s17
    %s22 = sphi 0, %s18
    %s23 = sphi 0, %s19
    %s24 = sphi 0, %s20
    %s25 = sphi 0, %s21
    %s26 = sphi 0, %s22
    %s27 = sphi 0, %s23
    %s49 = sphi 0, %s51
    %s52 = sphi 0, %s49
    %s53 = sphi 0, %s52
    %s69 = sphi 0, %s53
    %s79 = sphi 0, %s81
    %s82 = sphi 0, %s79
    %s83 = sphi 0, %s82
    %s99 = sphi 0, %s83
    %s105 = sphi 0, %s107
    %s108 = sphi 0, %s105
    %s109 = sphi 0, %s108
    %s125 = sphi 0, %s109
    %s135 = sphi 0, %s137
    %s138 = sphi 0, %s135
    %s139 = sphi 0, %s138
    %s155 = sphi 0, %s139
  $region4: #{deconv_s2_tanh.1} parent=0 // loop_header_branch
    %12 = sbr.rel (%p10) target = $region8
  $region5: #{deconv_s2_tanh.1} parent=0 // loop_body
    %s14 = ssub.s32 %s9, 1
    %s15 = ssub.s32 %s9, 2
    %s28 = sadd.s32 1, %s19
    %p29 = scmp.ge.s32.totalorder %s28, 1
    %s30 = scalar_select %p29, 0, %s28
    %s31 = sadd.s32 1, %s18
    %s32 = scalar_select %p29, %s31, %s18
    %p33 = scmp.ge.s32.totalorder %s32, 1
    %s34 = scalar_select %p33, 0, %s32
    %s35 = sadd.s32 1, %s17
    %s36 = scalar_select %p33, %s35, %s17
    %p37 = scmp.ge.s32.totalorder %s36, 1
    %s38 = scalar_select %p37, 0, %s36
    %s39 = sadd.s32 1, %s16
    %s40 = scalar_select %p37, %s39, %s16
    %p41 = scmp.ge.s32.totalorder %s40, 4
    %s42 = scalar_select %p41, 0, %s40
    %s43 = ssub.s32 %s16, %s42
    %s44 = ssub.s32 %s17, %s38
    %s45 = sor.u32 %s43, %s44
    %s46 = ssub.s32 %s19, %s30
    %s47 = sor.u32 %s45, %s46
    %p48 = scmp.eq.s32.totalorder %s47, 0
    %s50 = sadd.s32 %s49, 1
    %s51 = scalar_select %p48, %s49, %s50
    %p54 = pneg %p48
    %p55 = scmp.eq.s32.totalorder %s9, 3
    %p56 = por %p54, %p55
    %p57 = scmp.ne.s32.totalorder %s49, %s52
    %p58 = scmp.eq.s32.totalorder %s9, 0
    %p59 = por %p57, %p58
    %p60 = scmp.ne.s32.totalorder %s49, %s52
    %p61 = scmp.eq.s32.totalorder %s14, 3
    %p62 = por %p60, %p61
    %p63 = scmp.ne.s32.totalorder %s52, %s53
    %p64 = scmp.eq.s32.totalorder %s14, 0
    %p65 = por %p63, %p64
    %p66 = scmp.ne.s32.totalorder %s52, %s53
    %p67 = scmp.eq.s32.totalorder %s15, 3
    %p68 = por %p66, %p67
    %p70 = scmp.ne.s32.totalorder %s53, %s69
    %p71 = scmp.eq.s32.totalorder %s15, 0
    %p72 = por %p70, %p71
    %s73 = ssub.s32 %s16, %s42
    %s74 = ssub.s32 %s19, %s30
    %s75 = sor.u32 %s73, %s74
    %s76 = ssub.s32 %s18, %s34
    %s77 = sor.u32 %s75, %s76
    %p78 = scmp.eq.s32.totalorder %s77, 0
    %s80 = sadd.s32 %s79, 1
    %s81 = scalar_select %p78, %s79, %s80
    %p84 = pneg %p78
    %p85 = scmp.eq.s32.totalorder %s9, 3
    %p86 = por %p84, %p85
    %p87 = scmp.ne.s32.totalorder %s79, %s82
    %p88 = scmp.eq.s32.totalorder %s9, 0
    %p89 = por %p87, %p88
    %p90 = scmp.ne.s32.totalorder %s79, %s82
    %p91 = scmp.eq.s32.totalorder %s14, 3
    %p92 = por %p90, %p91
    %p93 = scmp.ne.s32.totalorder %s82, %s83
    %p94 = scmp.eq.s32.totalorder %s14, 0
    %p95 = por %p93, %p94
    %p96 = scmp.ne.s32.totalorder %s82, %s83
    %p97 = scmp.eq.s32.totalorder %s15, 3
    %p98 = por %p96, %p97
    %p100 = scmp.ne.s32.totalorder %s83, %s99
    %p101 = scmp.eq.s32.totalorder %s15, 0
    %p102 = por %p100, %p101
    %s103 = ssub.s32 %s18, %s34
    %p104 = scmp.eq.s32.totalorder %s103, 0
    %s106 = sadd.s32 %s105, 1
    %s107 = scalar_select %p104, %s105, %s106
    %p110 = pneg %p104
    %p111 = scmp.eq.s32.totalorder %s9, 3
    %p112 = por %p110, %p111
    %p113 = scmp.ne.s32.totalorder %s105, %s108
    %p114 = scmp.eq.s32.totalorder %s9, 0
    %p115 = por %p113, %p114
    %p116 = scmp.ne.s32.totalorder %s105, %s108
    %p117 = scmp.eq.s32.totalorder %s14, 3
    %p118 = por %p116, %p117
    %p119 = scmp.ne.s32.totalorder %s108, %s109
    %p120 = scmp.eq.s32.totalorder %s14, 0
    %p121 = por %p119, %p120
    %p122 = scmp.ne.s32.totalorder %s108, %s109
    %p123 = scmp.eq.s32.totalorder %s15, 3
    %p124 = por %p122, %p123
    %p126 = scmp.ne.s32.totalorder %s109, %s125
    %p127 = scmp.eq.s32.totalorder %s15, 0
    %p128 = por %p126, %p127
    %s129 = ssub.s32 %s16, %s42
    %s130 = ssub.s32 %s17, %s38
    %s131 = sor.u32 %s129, %s130
    %s132 = ssub.s32 %s18, %s34
    %s133 = sor.u32 %s131, %s132
    %p134 = scmp.eq.s32.totalorder %s133, 0
    %s136 = sadd.s32 %s135, 1
    %s137 = scalar_select %p134, %s135, %s136
    %p140 = pneg %p134
    %p141 = scmp.eq.s32.totalorder %s9, 3
    %p142 = por %p140, %p141
    %p143 = scmp.ne.s32.totalorder %s135, %s138
    %p144 = scmp.eq.s32.totalorder %s9, 0
    %p145 = por %p143, %p144
    %p146 = scmp.ne.s32.totalorder %s135, %s138
    %p147 = scmp.eq.s32.totalorder %s14, 3
    %p148 = por %p146, %p147
    %p149 = scmp.ne.s32.totalorder %s138, %s139
    %p150 = scmp.eq.s32.totalorder %s14, 0
    %p151 = por %p149, %p150
    %p152 = scmp.ne.s32.totalorder %s138, %s139
    %p153 = scmp.eq.s32.totalorder %s15, 3
    %p154 = por %p152, %p153
    %p156 = scmp.ne.s32.totalorder %s139, %s155
    %p157 = scmp.eq.s32.totalorder %s15, 0
    %p158 = por %p156, %p157
    %p159 = scmp.le.s32.totalorder 1, %s9
    %p160 = scmp.lt.s32.totalorder %s9, 5
    %p161 = pnand %p159, %p160
    %p162 = pneg %p161
    // Predicated region
    $region9: #{deconv_s2_tanh.1} parent=5 // pred_check
      _
    $region10: #{deconv_s2_tanh.1} parent=5 // pred_check_branch
      %164 = sbr.rel (%p161) target = $region12
    $region11: #{deconv_s2_tanh.1} parent=5 // pred_region
      %s165 = ssub.s32 %s9, 1
      // Predicated region
      $region13: #{deconv_s2_tanh.1} parent=11 // pred_check
        %p166 = pneg %p121
      $region14: #{deconv_s2_tanh.1} parent=11 // pred_check_branch
        %168 = sbr.rel (%p166) target = $region16
      $region15: #{deconv_s2_tanh.1} parent=11 // pred_region
        %p169 = scmp.lt.s32.totalorder %s22, 0
        %s170 = scalar_select %p169, %s22, 0
        %s171 = scalar_lea.vmem %s2, %s170
      $region16: #{deconv_s2_tanh.1} parent=11 // pred_fallthru
        _
    $region12: #{deconv_s2_tanh.1} parent=5 // pred_fallthru
      _
    %p172 = scmp.lt.s32.totalorder %s9, 4
    // Predicated region
    $region17: #{deconv_s2_tanh.1} parent=5 // pred_check
      %p173 = pneg %p172
    $region18: #{deconv_s2_tanh.1} parent=5 // pred_check_branch
      %175 = sbr.rel (%p173) target = $region20
    $region19: #{deconv_s2_tanh.1} parent=5 // pred_region
      // Predicated region
      $region21: #{deconv_s2_tanh.1} parent=19 // pred_check
        %p176 = pneg %p59
      $region22: #{deconv_s2_tanh.1} parent=19 // pred_check_branch
        %178 = sbr.rel (%p176) target = $region24
      $region23: #{deconv_s2_tanh.1} parent=19 // pred_region
        %s179 = smul.u32 16, %s17
        %s180 = smul.u32 4, %s19
        %p181 = scmp.lt.s32.totalorder %s16, 3
        %s182 = scalar_select %p181, %s16, 3
        %p183 = scmp.lt.s32.totalorder %s179, 15
        %s184 = scalar_select %p183, %s179, 15
        %p185 = scmp.lt.s32.totalorder %s180, 3
        %s186 = scalar_select %p185, %s180, 3
        %s187 = smul.addr %s184, 4
        %s188 = sadd.s32 %s186, %s187
        %s189 = smul.addr %s182, 64
        %s190 = sadd.s32 %s188, %s189
        %s191 = smul.addr %s190, 4
        %s192 = scalar_lea.vmem %s0, %s191
        %s193 = smul.u32 16, %s17
        %s194 = smul.u32 4, %s19
      $region24: #{deconv_s2_tanh.1} parent=19 // pred_fallthru
        _
      // Predicated region
      $region25: #{deconv_s2_tanh.1} parent=19 // pred_check
        %p195 = pneg %p89
      $region26: #{deconv_s2_tanh.1} parent=19 // pred_check_branch
        %197 = sbr.rel (%p195) target = $region28
      $region27: #{deconv_s2_tanh.1} parent=19 // pred_region
        %s198 = smul.u32 64, %s19
        %p199 = scmp.lt.s32.totalorder %s16, 3
        %s200 = scalar_select %p199, %s16, 3
        %p201 = scmp.lt.s32.totalorder %s198, 63
        %s202 = scalar_select %p201, %s198, 63
        %p203 = scmp.lt.s32.totalorder %s18, 0
        %s204 = scalar_select %p203, %s18, 0
        %s205 = sadd.s32 %s204, %s202
        %s206 = smul.addr %s200, 64
        %s207 = sadd.s32 %s205, %s206
        %s208 = smul.addr %s207, 4
        %s209 = scalar_lea.vmem %s1, %s208
        %s210 = smul.u32 64, %s19
      $region28: #{deconv_s2_tanh.1} parent=19 // pred_fallthru
        _
    $region20: #{deconv_s2_tanh.1} parent=5 // pred_fallthru
      _
    %p211 = scmp.le.s32.totalorder 1, %s9
    %p212 = scmp.lt.s32.totalorder %s9, 5
    %p213 = pnand %p211, %p212
    %p214 = pneg %p213
    // Predicated region
    $region29: #{deconv_s2_tanh.1} parent=5 // pred_check
      _
    $region30: #{deconv_s2_tanh.1} parent=5 // pred_check_branch
      %216 = sbr.rel (%p213) target = $region32
    $region31: #{deconv_s2_tanh.1} parent=5 // pred_region
      %s217 = ssub.s32 %s9, 1
      %s218 = smul.u32 16, %s21
      %s219 = smul.u32 4, %s23
      %p220 = scmp.lt.s32.totalorder %s20, 3
      %s221 = scalar_select %p220, %s20, 3
      %p222 = scmp.lt.s32.totalorder %s218, 15
      %s223 = scalar_select %p222, %s218, 15
      %p224 = scmp.lt.s32.totalorder %s219, 3
      %s225 = scalar_select %p224, %s219, 3
      %s226 = smul.addr %s223, 4
      %s227 = sadd.s32 %s225, %s226
      %s228 = smul.addr %s221, 64
      %s229 = sadd.s32 %s227, %s228
      %s230 = smul.addr %s229, 4
      %s231 = scalar_lea.vmem %s0, %s230
      %p232 = pneg %p65
      %p233 = pneg %p62
      %s234 = smul.u32 64, %s23
      %p235 = scmp.lt.s32.totalorder %s20, 3
      %s236 = scalar_select %p235, %s20, 3
      %p237 = scmp.lt.s32.totalorder %s234, 63
      %s238 = scalar_select %p237, %s234, 63
      %p239 = scmp.lt.s32.totalorder %s22, 0
      %s240 = scalar_select %p239, %s22, 0
      %s241 = sadd.s32 %s240, %s238
      %s242 = smul.addr %s236, 64
      %s243 = sadd.s32 %s241, %s242
      %s244 = smul.addr %s243, 4
      %s245 = scalar_lea.vmem %s1, %s244
      %p246 = pneg %p95
      %p247 = pneg %p92
      %p248 = scmp.lt.s32.totalorder %s22, 0
      %s249 = scalar_select %p248, %s22, 0
      %s250 = scalar_lea.vmem %s2, %s249
      %p251 = pneg %p121
      %p252 = pneg %p118
      %p253 = pneg %p151
      %p254 = pneg %p148
      %s255 = smul.u32 16, %s21
      %p256 = scmp.lt.s32.totalorder %s20, 3
      %s257 = scalar_select %p256, %s20, 3
      %p258 = scmp.lt.s32.totalorder %s255, 15
      %s259 = scalar_select %p258, %s255, 15
      %p260 = scmp.lt.s32.totalorder %s22, 0
      %s261 = scalar_select %p260, %s22, 0
      %s262 = sadd.s32 %s261, %s259
      %s263 = smul.addr %s257, 16
      %s264 = sadd.s32 %s262, %s263
      %s265 = smul.addr %s264, 4
      %s266 = scalar_lea.vmem %s3, %s265
      %s267 = smul.u32 16, %s21
      %s268 = smul.u32 4, %s23
      %p269 = scmp.lt.s32.totalorder %s20, 3
      %s270 = scalar_select %p269, %s20, 3
      %p271 = scmp.lt.s32.totalorder %s267, 15
      %s272 = scalar_select %p271, %s267, 15
      %p273 = scmp.lt.s32.totalorder %s268, 3
      %s274 = scalar_select %p273, %s268, 3
      %s275 = smul.addr %s272, 4
      %s276 = sadd.s32 %s274, %s275
      %s277 = smul.addr %s270, 64
      %s278 = sadd.s32 %s276, %s277
      %s279 = smul.addr %s278, 4
      %s280 = scalar_lea.vmem %s0, %s279
      %s281 = smul.u32 16, %s21
      %s282 = smul.u32 4, %s23
      %s283 = smul.u32 64, %s23
      %p284 = scmp.lt.s32.totalorder %s20, 3
      %s285 = scalar_select %p284, %s20, 3
      %p286 = scmp.lt.s32.totalorder %s283, 63
      %s287 = scalar_select %p286, %s283, 63
      %p288 = scmp.lt.s32.totalorder %s22, 0
      %s289 = scalar_select %p288, %s22, 0
      %s290 = sadd.s32 %s289, %s287
      %s291 = smul.addr %s285, 64
      %s292 = sadd.s32 %s290, %s291
      %s293 = smul.addr %s292, 4
      %s294 = scalar_lea.vmem %s1, %s293
      %s295 = smul.u32 64, %s23
      %p296 = scmp.lt.s32.totalorder %s22, 0
      %s297 = scalar_select %p296, %s22, 0
      %s298 = scalar_lea.vmem %s2, %s297
      %s299 = smul.u32 16, %s21
      %p300 = scmp.lt.s32.totalorder %s20, 3
      %s301 = scalar_select %p300, %s20, 3
      %p302 = scmp.lt.s32.totalorder %s299, 15
      %s303 = scalar_select %p302, %s299, 15
      %p304 = scmp.lt.s32.totalorder %s22, 0
      %s305 = scalar_select %p304, %s22, 0
      %s306 = sadd.s32 %s305, %s303
      %s307 = smul.addr %s301, 16
      %s308 = sadd.s32 %s306, %s307
      %s309 = smul.addr %s308, 4
      %s310 = scalar_lea.vmem %s3, %s309
      %s311 = smul.u32 16, %s21
      %p313 = scmp.eq.s32.totalorder %s23, 0
      // Predicated region
      $region33: #{deconv_s2_tanh.1} parent=31 // pred_check
        %p314 = pneg %p313
      $region34: #{deconv_s2_tanh.1} parent=31 // pred_check_branch
        %316 = sbr.rel (%p314) target = $region36
      $region35: #{deconv_s2_tanh.1} parent=31 // pred_region
        %317 = vst [vmem:[#allocation2] sm:$0xff] 0.0
        %318 = vst [vmem:[#allocation2 + $0x8] sm:$0xff] 0.0
        %319 = vst [vmem:[#allocation2 + $0x10] sm:$0xff] 0.0
        %320 = vst [vmem:[#allocation2 + $0x18] sm:$0xff] 0.0
        %321 = vst [vmem:[#allocation2 + $0x20] sm:$0xff] 0.0
        %322 = vst [vmem:[#allocation2 + $0x28] sm:$0xff] 0.0
        %323 = vst [vmem:[#allocation2 + $0x30] sm:$0xff] 0.0
        %324 = vst [vmem:[#allocation2 + $0x38] sm:$0xff] 0.0
        %325 = vst [vmem:[#allocation2 + $0x40] sm:$0xff] 0.0
        %326 = vst [vmem:[#allocation2 + $0x48] sm:$0xff] 0.0
        %327 = vst [vmem:[#allocation2 + $0x50] sm:$0xff] 0.0
        %328 = vst [vmem:[#allocation2 + $0x58] sm:$0xff] 0.0
        %329 = vst [vmem:[#allocation2 + $0x60] sm:$0xff] 0.0
        %330 = vst [vmem:[#allocation2 + $0x68] sm:$0xff] 0.0
        %331 = vst [vmem:[#allocation2 + $0x70] sm:$0xff] 0.0
        %332 = vst [vmem:[#allocation2 + $0x78] sm:$0xff] 0.0
      $region36: #{deconv_s2_tanh.1} parent=31 // pred_fallthru
        _
      %v333 = vld [vmem:[#allocation2] sm:$0xff]
      %v334 = vld [vmem:[#allocation2 + $0x8] sm:$0xff]
      %v335 = vld [vmem:[#allocation2 + $0x10] sm:$0xff]
      %v336 = vld [vmem:[#allocation2 + $0x18] sm:$0xff]
      %v337 = vld [vmem:[#allocation2 + $0x20] sm:$0xff]
      %v338 = vld [vmem:[#allocation2 + $0x28] sm:$0xff]
      %v339 = vld [vmem:[#allocation2 + $0x30] sm:$0xff]
      %v340 = vld [vmem:[#allocation2 + $0x38] sm:$0xff]
      %v341 = vld [vmem:[#allocation2 + $0x40] sm:$0xff]
      %v342 = vld [vmem:[#allocation2 + $0x48] sm:$0xff]
      %v343 = vld [vmem:[#allocation2 + $0x50] sm:$0xff]
      %v344 = vld [vmem:[#allocation2 + $0x58] sm:$0xff]
      %v345 = vld [vmem:[#allocation2 + $0x60] sm:$0xff]
      %v346 = vld [vmem:[#allocation2 + $0x68] sm:$0xff]
      %v347 = vld [vmem:[#allocation2 + $0x70] sm:$0xff]
      %v348 = vld [vmem:[#allocation2 + $0x78] sm:$0xff]
      %v349 = vld [vmem:[%s280] sm:$0xff]
      %v350 = vld [vmem:[%s280 + $0x8] sm:$0xff]
      %v351 = vld [vmem:[%s280 + $0x10] sm:$0xff]
      %v352 = vld [vmem:[%s280 + $0x18] sm:$0xff]
      %v353 = vld [vmem:[%s280 + $0x20] sm:$0xff]
      %v354 = vld [vmem:[%s280 + $0x28] sm:$0xff]
      %v355 = vld [vmem:[%s280 + $0x30] sm:$0xff]
      %v356 = vld [vmem:[%s280 + $0x38] sm:$0xff]
      %v357 = vld [vmem:[%s280 + $0x40] sm:$0xff]
      %v358 = vld [vmem:[%s280 + $0x48] sm:$0xff]
      %v359 = vld [vmem:[%s280 + $0x50] sm:$0xff]
      %v360 = vld [vmem:[%s280 + $0x58] sm:$0xff]
      %v361 = vld [vmem:[%s280 + $0x60] sm:$0xff]
      %v362 = vld [vmem:[%s280 + $0x68] sm:$0xff]
      %v363 = vld [vmem:[%s280 + $0x70] sm:$0xff]
      %v364 = vld [vmem:[%s280 + $0x78] sm:$0xff]
      %v365 = vld [vmem:[%s280 + $0x80] sm:$0xff]
      %v366 = vld [vmem:[%s280 + $0x88] sm:$0xff]
      %v367 = vld [vmem:[%s280 + $0x90] sm:$0xff]
      %v368 = vld [vmem:[%s280 + $0x98] sm:$0xff]
      %v369 = vld [vmem:[%s280 + $0xa0] sm:$0xff]
      %v370 = vld [vmem:[%s280 + $0xa8] sm:$0xff]
      %v371 = vld [vmem:[%s280 + $0xb0] sm:$0xff]
      %v372 = vld [vmem:[%s280 + $0xb8] sm:$0xff]
      %v373 = vld [vmem:[%s280 + $0xc0] sm:$0xff]
      %v374 = vld [vmem:[%s280 + $0xc8] sm:$0xff]
      %v375 = vld [vmem:[%s280 + $0xd0] sm:$0xff]
      %v376 = vld [vmem:[%s280 + $0xd8] sm:$0xff]
      %v377 = vld [vmem:[%s280 + $0xe0] sm:$0xff]
      %v378 = vld [vmem:[%s280 + $0xe8] sm:$0xff]
      %v379 = vld [vmem:[%s280 + $0xf0] sm:$0xff]
      %v380 = vld [vmem:[%s280 + $0xf8] sm:$0xff]
      %v381 = vld [vmem:[%s294] sm:$0xf]
      %v382 = vld [vmem:[%s294 + $0x4] sm:$0xf]
      %v383 = vld [vmem:[%s294 + $0x8] sm:$0xf]
      %v384 = vld [vmem:[%s294 + $0xc] sm:$0xf]
      %v385 = vld [vmem:[%s294 + $0x10] sm:$0xf]
      %v386 = vld [vmem:[%s294 + $0x14] sm:$0xf]
      %v387 = vld [vmem:[%s294 + $0x18] sm:$0xf]
      %v388 = vld [vmem:[%s294 + $0x1c] sm:$0xf]
      %v389 = vld [vmem:[%s294 + $0x20] sm:$0xf]
      %v390 = vld [vmem:[%s294 + $0x24] sm:$0xf]
      %v391 = vld [vmem:[%s294 + $0x28] sm:$0xf]
      %v392 = vld [vmem:[%s294 + $0x2c] sm:$0xf]
      %v393 = vld [vmem:[%s294 + $0x30] sm:$0xf]
      %v394 = vld [vmem:[%s294 + $0x34] sm:$0xf]
      %v395 = vld [vmem:[%s294 + $0x38] sm:$0xf]
      %v396 = vld [vmem:[%s294 + $0x3c] sm:$0xf]
      %v397 = vld [vmem:[%s294 + $0x40] sm:$0xf]
      %v398 = vld [vmem:[%s294 + $0x44] sm:$0xf]
      %v399 = vld [vmem:[%s294 + $0x48] sm:$0xf]
      %v400 = vld [vmem:[%s294 + $0x4c] sm:$0xf]
      %v401 = vld [vmem:[%s294 + $0x50] sm:$0xf]
      %v402 = vld [vmem:[%s294 + $0x54] sm:$0xf]
      %v403 = vld [vmem:[%s294 + $0x58] sm:$0xf]
      %v404 = vld [vmem:[%s294 + $0x5c] sm:$0xf]
      %v405 = vld [vmem:[%s294 + $0x60] sm:$0xf]
      %v406 = vld [vmem:[%s294 + $0x64] sm:$0xf]
      %v407 = vld [vmem:[%s294 + $0x68] sm:$0xf]
      %v408 = vld [vmem:[%s294 + $0x6c] sm:$0xf]
      %v409 = vld [vmem:[%s294 + $0x70] sm:$0xf]
      %v410 = vld [vmem:[%s294 + $0x74] sm:$0xf]
      %v411 = vld [vmem:[%s294 + $0x78] sm:$0xf]
      %v412 = vld [vmem:[%s294 + $0x7c] sm:$0xf]
      %v413 = vld [vmem:[%s294 + $0x80] sm:$0xf]
      %v414 = vld [vmem:[%s294 + $0x84] sm:$0xf]
      %v415 = vld [vmem:[%s294 + $0x88] sm:$0xf]
      %v416 = vld [vmem:[%s294 + $0x8c] sm:$0xf]
      %v417 = vld [vmem:[%s294 + $0x90] sm:$0xf]
      %v418 = vld [vmem:[%s294 + $0x94] sm:$0xf]
      %v419 = vld [vmem:[%s294 + $0x98] sm:$0xf]
      %v420 = vld [vmem:[%s294 + $0x9c] sm:$0xf]
      %v421 = vld [vmem:[%s294 + $0xa0] sm:$0xf]
      %v422 = vld [vmem:[%s294 + $0xa4] sm:$0xf]
      %v423 = vld [vmem:[%s294 + $0xa8] sm:$0xf]
      %v424 = vld [vmem:[%s294 + $0xac] sm:$0xf]
      %v425 = vld [vmem:[%s294 + $0xb0] sm:$0xf]
      %v426 = vld [vmem:[%s294 + $0xb4] sm:$0xf]
      %v427 = vld [vmem:[%s294 + $0xb8] sm:$0xf]
      %v428 = vld [vmem:[%s294 + $0xbc] sm:$0xf]
      %v429 = vld [vmem:[%s294 + $0xc0] sm:$0xf]
      %v430 = vld [vmem:[%s294 + $0xc4] sm:$0xf]
      %v431 = vld [vmem:[%s294 + $0xc8] sm:$0xf]
      %v432 = vld [vmem:[%s294 + $0xcc] sm:$0xf]
      %v433 = vld [vmem:[%s294 + $0xd0] sm:$0xf]
      %v434 = vld [vmem:[%s294 + $0xd4] sm:$0xf]
      %v435 = vld [vmem:[%s294 + $0xd8] sm:$0xf]
      %v436 = vld [vmem:[%s294 + $0xdc] sm:$0xf]
      %v437 = vld [vmem:[%s294 + $0xe0] sm:$0xf]
      %v438 = vld [vmem:[%s294 + $0xe4] sm:$0xf]
      %v439 = vld [vmem:[%s294 + $0xe8] sm:$0xf]
      %v440 = vld [vmem:[%s294 + $0xec] sm:$0xf]
      %v441 = vld [vmem:[%s294 + $0xf0] sm:$0xf]
      %v442 = vld [vmem:[%s294 + $0xf4] sm:$0xf]
      %v443 = vld [vmem:[%s294 + $0xf8] sm:$0xf]
      %v444 = vld [vmem:[%s294 + $0xfc] sm:$0xf]
      %v477 = vunpack.c.l.b16 %v349
      %v478 = vunpack.c.h.b16 %v349
      %v479 = vunpack.c.l.b16 %v350
      %v480 = vunpack.c.h.b16 %v350
      %v481 = vunpack.c.l.b16 %v351
      %v482 = vunpack.c.h.b16 %v351
      %v483 = vunpack.c.l.b16 %v352
      %v484 = vunpack.c.h.b16 %v352
      %v485 = vunpack.c.l.b16 %v353
      %v486 = vunpack.c.h.b16 %v353
      %v487 = vunpack.c.l.b16 %v354
      %v488 = vunpack.c.h.b16 %v354
      %v489 = vunpack.c.l.b16 %v355
      %v490 = vunpack.c.h.b16 %v355
      %v491 = vunpack.c.l.b16 %v356
      %v492 = vunpack.c.h.b16 %v356
      %v493 = vunpack.c.l.b16 %v357
      %v494 = vunpack.c.h.b16 %v357
      %v495 = vunpack.c.l.b16 %v358
      %v496 = vunpack.c.h.b16 %v358
      %v497 = vunpack.c.l.b16 %v359
      %v498 = vunpack.c.h.b16 %v359
      %v499 = vunpack.c.l.b16 %v360
      %v500 = vunpack.c.h.b16 %v360
      %v501 = vunpack.c.l.b16 %v361
      %v502 = vunpack.c.h.b16 %v361
      %v503 = vunpack.c.l.b16 %v362
      %v504 = vunpack.c.h.b16 %v362
      %v505 = vunpack.c.l.b16 %v363
      %v506 = vunpack.c.h.b16 %v363
      %v507 = vunpack.c.l.b16 %v364
      %v508 = vunpack.c.h.b16 %v364
      %v509 = vunpack.c.l.b16 %v365
      %v510 = vunpack.c.h.b16 %v365
      %v511 = vunpack.c.l.b16 %v366
      %v512 = vunpack.c.h.b16 %v366
      %v513 = vunpack.c.l.b16 %v367
      %v514 = vunpack.c.h.b16 %v367
      %v515 = vunpack.c.l.b16 %v368
      %v516 = vunpack.c.h.b16 %v368
      %v517 = vunpack.c.l.b16 %v369
      %v518 = vunpack.c.h.b16 %v369
      %v519 = vunpack.c.l.b16 %v370
      %v520 = vunpack.c.h.b16 %v370
      %v521 = vunpack.c.l.b16 %v371
      %v522 = vunpack.c.h.b16 %v371
      %v523 = vunpack.c.l.b16 %v372
      %v524 = vunpack.c.h.b16 %v372
      %v525 = vunpack.c.l.b16 %v373
      %v526 = vunpack.c.h.b16 %v373
      %v527 = vunpack.c.l.b16 %v374
      %v528 = vunpack.c.h.b16 %v374
      %v529 = vunpack.c.l.b16 %v375
      %v530 = vunpack.c.h.b16 %v375
      %v531 = vunpack.c.l.b16 %v376
      %v532 = vunpack.c.h.b16 %v376
      %v533 = vunpack.c.l.b16 %v377
      %v534 = vunpack.c.h.b16 %v377
      %v535 = vunpack.c.l.b16 %v378
      %v536 = vunpack.c.h.b16 %v378
      %v537 = vunpack.c.l.b16 %v379
      %v538 = vunpack.c.h.b16 %v379
      %v539 = vunpack.c.l.b16 %v380
      %v540 = vunpack.c.h.b16 %v380
      %v541 = vpack.c.b16 %v481, %v477
      %v542 = vpack.c.b16 %v482, %v478
      %v543 = vpack.c.b16 %v483, %v479
      %v544 = vpack.c.b16 %v484, %v480
      %v545 = vpack.c.b16 %v489, %v485
      %v546 = vpack.c.b16 %v490, %v486
      %v547 = vpack.c.b16 %v491, %v487
      %v548 = vpack.c.b16 %v492, %v488
      %v549 = vpack.c.b16 %v497, %v493
      %v550 = vpack.c.b16 %v498, %v494
      %v551 = vpack.c.b16 %v499, %v495
      %v552 = vpack.c.b16 %v500, %v496
      %v553 = vpack.c.b16 %v505, %v501
      %v554 = vpack.c.b16 %v506, %v502
      %v555 = vpack.c.b16 %v507, %v503
      %v556 = vpack.c.b16 %v508, %v504
      %v557 = vpack.c.b16 %v513, %v509
      %v558 = vpack.c.b16 %v514, %v510
      %v559 = vpack.c.b16 %v515, %v511
      %v560 = vpack.c.b16 %v516, %v512
      %v561 = vpack.c.b16 %v521, %v517
      %v562 = vpack.c.b16 %v522, %v518
      %v563 = vpack.c.b16 %v523, %v519
      %v564 = vpack.c.b16 %v524, %v520
      %v565 = vpack.c.b16 %v529, %v525
      %v566 = vpack.c.b16 %v530, %v526
      %v567 = vpack.c.b16 %v531, %v527
      %v568 = vpack.c.b16 %v532, %v528
      %v569 = vpack.c.b16 %v537, %v533
      %v570 = vpack.c.b16 %v538, %v534
      %v571 = vpack.c.b16 %v539, %v535
      %v572 = vpack.c.b16 %v540, %v536
      %v669 = vunpack.c.l.b16 %v381
      %v670 = vunpack.c.l.b16 %v382
      %v671 = vunpack.c.l.b16 %v383
      %v672 = vunpack.c.l.b16 %v384
      %v673 = vunpack.c.l.b16 %v385
      %v674 = vunpack.c.l.b16 %v386
      %v675 = vunpack.c.l.b16 %v387
      %v676 = vunpack.c.l.b16 %v388
      %v677 = vunpack.c.l.b16 %v389
      %v678 = vunpack.c.l.b16 %v390
      %v679 = vunpack.c.l.b16 %v391
      %v680 = vunpack.c.l.b16 %v392
      %v681 = vunpack.c.l.b16 %v393
      %v682 = vunpack.c.l.b16 %v394
      %v683 = vunpack.c.l.b16 %v395
      %v684 = vunpack.c.l.b16 %v396
      %v685 = vunpack.c.l.b16 %v397
      %v686 = vunpack.c.l.b16 %v398
      %v687 = vunpack.c.l.b16 %v399
      %v688 = vunpack.c.l.b16 %v400
      %v689 = vunpack.c.l.b16 %v401
      %v690 = vunpack.c.l.b16 %v402
      %v691 = vunpack.c.l.b16 %v403
      %v692 = vunpack.c.l.b16 %v404
      %v693 = vunpack.c.l.b16 %v405
      %v694 = vunpack.c.l.b16 %v406
      %v695 = vunpack.c.l.b16 %v407
      %v696 = vunpack.c.l.b16 %v408
      %v697 = vunpack.c.l.b16 %v409
      %v698 = vunpack.c.l.b16 %v410
      %v699 = vunpack.c.l.b16 %v411
      %v700 = vunpack.c.l.b16 %v412
      %v701 = vunpack.c.l.b16 %v413
      %v702 = vunpack.c.l.b16 %v414
      %v703 = vunpack.c.l.b16 %v415
      %v704 = vunpack.c.l.b16 %v416
      %v705 = vunpack.c.l.b16 %v417
      %v706 = vunpack.c.l.b16 %v418
      %v707 = vunpack.c.l.b16 %v419
      %v708 = vunpack.c.l.b16 %v420
      %v709 = vunpack.c.l.b16 %v421
      %v710 = vunpack.c.l.b16 %v422
      %v711 = vunpack.c.l.b16 %v423
      %v712 = vunpack.c.l.b16 %v424
      %v713 = vunpack.c.l.b16 %v425
      %v714 = vunpack.c.l.b16 %v426
      %v715 = vunpack.c.l.b16 %v427
      %v716 = vunpack.c.l.b16 %v428
      %v717 = vunpack.c.l.b16 %v429
      %v718 = vunpack.c.l.b16 %v430
      %v719 = vunpack.c.l.b16 %v431
      %v720 = vunpack.c.l.b16 %v432
      %v721 = vunpack.c.l.b16 %v433
      %v722 = vunpack.c.l.b16 %v434
      %v723 = vunpack.c.l.b16 %v435
      %v724 = vunpack.c.l.b16 %v436
      %v725 = vunpack.c.l.b16 %v437
      %v726 = vunpack.c.l.b16 %v438
      %v727 = vunpack.c.l.b16 %v439
      %v728 = vunpack.c.l.b16 %v440
      %v729 = vunpack.c.l.b16 %v441
      %v730 = vunpack.c.l.b16 %v442
      %v731 = vunpack.c.l.b16 %v443
      %v732 = vunpack.c.l.b16 %v444
      %v733 = vpack.c.b16 %v670, %v669
      %v734 = vpack.c.b16 %v672, %v671
      %v735 = vpack.c.b16 %v674, %v673
      %v736 = vpack.c.b16 %v676, %v675
      %v737 = vpack.c.b16 %v678, %v677
      %v738 = vpack.c.b16 %v680, %v679
      %v739 = vpack.c.b16 %v682, %v681
      %v740 = vpack.c.b16 %v684, %v683
      %v741 = vpack.c.b16 %v686, %v685
      %v742 = vpack.c.b16 %v688, %v687
      %v743 = vpack.c.b16 %v690, %v689
      %v744 = vpack.c.b16 %v692, %v691
      %v745 = vpack.c.b16 %v694, %v693
      %v746 = vpack.c.b16 %v696, %v695
      %v747 = vpack.c.b16 %v698, %v697
      %v748 = vpack.c.b16 %v700, %v699
      %v749 = vpack.c.b16 %v702, %v701
      %v750 = vpack.c.b16 %v704, %v703
      %v751 = vpack.c.b16 %v706, %v705
      %v752 = vpack.c.b16 %v708, %v707
      %v753 = vpack.c.b16 %v710, %v709
      %v754 = vpack.c.b16 %v712, %v711
      %v755 = vpack.c.b16 %v714, %v713
      %v756 = vpack.c.b16 %v716, %v715
      %v757 = vpack.c.b16 %v718, %v717
      %v758 = vpack.c.b16 %v720, %v719
      %v759 = vpack.c.b16 %v722, %v721
      %v760 = vpack.c.b16 %v724, %v723
      %v761 = vpack.c.b16 %v726, %v725
      %v762 = vpack.c.b16 %v728, %v727
      %v763 = vpack.c.b16 %v730, %v729
      %v764 = vpack.c.b16 %v732, %v731
      %797 = vmatprep.subr.bf16.mxu0 0
      %798 = vmatpush1.bf16.msra.mxu0 %v733
      %799 = vmatprep.subr.bf16.mxu0 0
      %800 = vmatpush1.bf16.msra.mxu0 %v734
      %801 = vmatprep.subr.bf16.mxu0 0
      %802 = vmatpush1.bf16.msra.mxu0 %v735
      %803 = vmatprep.subr.bf16.mxu0 0
      %804 = vmatpush1.bf16.msra.mxu0 %v736
      %805 = vmatprep.subr.bf16.mxu0 0
      %806 = vmatpush1.bf16.msra.mxu0 %v737
      %807 = vmatprep.subr.bf16.mxu0 0
      %808 = vmatpush1.bf16.msra.mxu0 %v738
      %809 = vmatprep.subr.bf16.mxu0 0
      %810 = vmatpush1.bf16.msra.mxu0 %v739
      %811 = vmatprep.subr.bf16.mxu0 0
      %812 = vmatpush1.bf16.msra.mxu0 %v740
      %813 = vmatprep.subr.bf16.mxu0 0
      %814 = vmatpush1.bf16.msra.mxu0 %v741
      %815 = vmatprep.subr.bf16.mxu0 0
      %816 = vmatpush1.bf16.msra.mxu0 %v742
      %817 = vmatprep.subr.bf16.mxu0 0
      %818 = vmatpush1.bf16.msra.mxu0 %v743
      %819 = vmatprep.subr.bf16.mxu0 0
      %820 = vmatpush1.bf16.msra.mxu0 %v744
      %821 = vmatprep.subr.bf16.mxu0 0
      %822 = vmatpush1.bf16.msra.mxu0 %v745
      %823 = vmatprep.subr.bf16.mxu0 0
      %824 = vmatpush1.bf16.msra.mxu0 %v746
      %825 = vmatprep.subr.bf16.mxu0 0
      %826 = vmatpush1.bf16.msra.mxu0 %v747
      %827 = vmatprep.subr.bf16.mxu0 0
      %828 = vmatpush1.bf16.msra.mxu0 %v748
      %829 = vmatprep.mubr.bf16.mxu0 %v542
      %830 = vmatmul.mubr.bf16.gmra.mrb[0].mxu0 %v541
      %v831 = vpop.f32.mrb[0].mxu0
      %v832 = vadd.f32 0.0, %v831
      %v833 = vpop.f32.mrb[0].mxu0
      %v834 = vpop.f32.mrb[0].mxu0
      %v835 = vadd.f32 0.0, %v834
      %v836 = vpop.f32.mrb[0].mxu0
      %837 = vmatprep.mubr.bf16.mxu0 %v546
      %838 = vmatmul.mubr.bf16.gmra.mrb[0].mxu0 %v545
      %v839 = vpop.f32.mrb[0].mxu0
      %v840 = vadd.f32 0.0, %v839
      %v841 = vpop.f32.mrb[0].mxu0
      %v842 = vpop.f32.mrb[0].mxu0
      %v843 = vadd.f32 0.0, %v842
      %v844 = vpop.f32.mrb[0].mxu0
      %845 = vmatprep.mubr.bf16.mxu0 %v550
      %846 = vmatmul.mubr.bf16.gmra.mrb[0].mxu0 %v549
      %v847 = vpop.f32.mrb[0].mxu0
      %v848 = vadd.f32 0.0, %v847
      %v849 = vpop.f32.mrb[0].mxu0
      %v850 = vpop.f32.mrb[0].mxu0
      %v851 = vadd.f32 0.0, %v850
      %v852 = vpop.f32.mrb[0].mxu0
      %853 = vmatprep.mubr.bf16.mxu0 %v554
      %854 = vmatmul.mubr.bf16.gmra.mrb[0].mxu0 %v553
      %v855 = vpop.f32.mrb[0].mxu0
      %v856 = vadd.f32 0.0, %v855
      %v857 = vpop.f32.mrb[0].mxu0
      %v858 = vpop.f32.mrb[0].mxu0
      %v859 = vadd.f32 0.0, %v858
      %v860 = vpop.f32.mrb[0].mxu0
      %861 = vmatprep.mubr.bf16.mxu0 %v558
      %862 = vmatmul.mubr.bf16.gmra.mrb[0].mxu0 %v557
      %v863 = vpop.f32.mrb[0].mxu0
      %v864 = vadd.f32 0.0, %v863
      %v865 = vpop.f32.mrb[0].mxu0
      %v866 = vpop.f32.mrb[0].mxu0
      %v867 = vadd.f32 0.0, %v866
      %v868 = vpop.f32.mrb[0].mxu0
      %869 = vmatprep.mubr.bf16.mxu0 %v562
      %870 = vmatmul.mubr.bf16.gmra.mrb[0].mxu0 %v561
      %v871 = vpop.f32.mrb[0].mxu0
      %v872 = vadd.f32 0.0, %v871
      %v873 = vpop.f32.mrb[0].mxu0
      %v874 = vpop.f32.mrb[0].mxu0
      %v875 = vadd.f32 0.0, %v874
      %v876 = vpop.f32.mrb[0].mxu0
      %877 = vmatprep.mubr.bf16.mxu0 %v566
      %878 = vmatmul.mubr.bf16.gmra.mrb[0].mxu0 %v565
      %v879 = vpop.f32.mrb[0].mxu0
      %v880 = vadd.f32 0.0, %v879
      %v881 = vpop.f32.mrb[0].mxu0
      %v882 = vpop.f32.mrb[0].mxu0
      %v883 = vadd.f32 0.0, %v882
      %v884 = vpop.f32.mrb[0].mxu0
      %885 = vmatprep.mubr.bf16.mxu0 %v570
      %886 = vmatmul.mubr.bf16.gmra.mrb[0].mxu0 %v569
      %v887 = vpop.f32.mrb[0].mxu0
      %v888 = vadd.f32 0.0, %v887
      %v889 = vpop.f32.mrb[0].mxu0
      %v890 = vpop.f32.mrb[0].mxu0
      %v891 = vadd.f32 0.0, %v890
      %v892 = vpop.f32.mrb[0].mxu0
      %893 = vdwg.mxu0
      %894 = vmatprep.subr.bf16.mxu0 0
      %895 = vmatpush1.bf16.msra.mxu0 %v749
      %896 = vmatprep.subr.bf16.mxu0 0
      %897 = vmatpush1.bf16.msra.mxu0 %v750
      %898 = vmatprep.subr.bf16.mxu0 0
      %899 = vmatpush1.bf16.msra.mxu0 %v751
      %900 = vmatprep.subr.bf16.mxu0 0
      %901 = vmatpush1.bf16.msra.mxu0 %v752
      %902 = vmatprep.subr.bf16.mxu0 0
      %903 = vmatpush1.bf16.msra.mxu0 %v753
      %904 = vmatprep.subr.bf16.mxu0 0
      %905 = vmatpush1.bf16.msra.mxu0 %v754
      %906 = vmatprep.subr.bf16.mxu0 0
      %907 = vmatpush1.bf16.msra.mxu0 %v755
      %908 = vmatprep.subr.bf16.mxu0 0
      %909 = vmatpush1.bf16.msra.mxu0 %v756
      %910 = vmatprep.subr.bf16.mxu0 0
      %911 = vmatpush1.bf16.msra.mxu0 %v757
      %912 = vmatprep.subr.bf16.mxu0 0
      %913 = vmatpush1.bf16.msra.mxu0 %v758
      %914 = vmatprep.subr.bf16.mxu0 0
      %915 = vmatpush1.bf16.msra.mxu0 %v759
      %916 = vmatprep.subr.bf16.mxu0 0
      %917 = vmatpush1.bf16.msra.mxu0 %v760
      %918 = vmatprep.subr.bf16.mxu0 0
      %919 = vmatpush1.bf16.msra.mxu0 %v761
      %920 = vmatprep.subr.bf16.mxu0 0
      %921 = vmatpush1.bf16.msra.mxu0 %v762
      %922 = vmatprep.subr.bf16.mxu0 0
      %923 = vmatpush1.bf16.msra.mxu0 %v763
      %924 = vmatprep.subr.bf16.mxu0 0
      %925 = vmatpush1.bf16.msra.mxu0 %v764
      %926 = vmatprep.mubr.bf16.mxu0 %v544
      %927 = vmatmul.mubr.bf16.gmra.mrb[0].mxu0 %v543
      %v928 = vpop.f32.mrb[0].mxu0
      %v929 = vadd.f32 %v832, %v928
      %v930 = vpop.f32.mrb[0].mxu0
      %v931 = vpop.f32.mrb[0].mxu0
      %v932 = vadd.f32 %v835, %v931
      %v933 = vpop.f32.mrb[0].mxu0
      %934 = vmatprep.mubr.bf16.mxu0 %v548
      %935 = vmatmul.mubr.bf16.gmra.mrb[0].mxu0 %v547
      %v936 = vpop.f32.mrb[0].mxu0
      %v937 = vadd.f32 %v840, %v936
      %v938 = vpop.f32.mrb[0].mxu0
      %v939 = vpop.f32.mrb[0].mxu0
      %v940 = vadd.f32 %v843, %v939
      %v941 = vpop.f32.mrb[0].mxu0
      %942 = vmatprep.mubr.bf16.mxu0 %v552
      %943 = vmatmul.mubr.bf16.gmra.mrb[0].mxu0 %v551
      %v944 = vpop.f32.mrb[0].mxu0
      %v945 = vadd.f32 %v848, %v944
      %v946 = vpop.f32.mrb[0].mxu0
      %v947 = vpop.f32.mrb[0].mxu0
      %v948 = vadd.f32 %v851, %v947
      %v949 = vpop.f32.mrb[0].mxu0
      %950 = vmatprep.mubr.bf16.mxu0 %v556
      %951 = vmatmul.mubr.bf16.gmra.mrb[0].mxu0 %v555
      %v952 = vpop.f32.mrb[0].mxu0
      %v953 = vadd.f32 %v856, %v952
      %v954 = vpop.f32.mrb[0].mxu0
      %v955 = vpop.f32.mrb[0].mxu0
      %v956 = vadd.f32 %v859, %v955
      %v957 = vpop.f32.mrb[0].mxu0
      %958 = vmatprep.mubr.bf16.mxu0 %v560
      %959 = vmatmul.mubr.bf16.gmra.mrb[0].mxu0 %v559
      %v960 = vpop.f32.mrb[0].mxu0
      %v961 = vadd.f32 %v864, %v960
      %v962 = vpop.f32.mrb[0].mxu0
      %v963 = vpop.f32.mrb[0].mxu0
      %v964 = vadd.f32 %v867, %v963
      %v965 = vpop.f32.mrb[0].mxu0
      %966 = vmatprep.mubr.bf16.mxu0 %v564
      %967 = vmatmul.mubr.bf16.gmra.mrb[0].mxu0 %v563
      %v968 = vpop.f32.mrb[0].mxu0
      %v969 = vadd.f32 %v872, %v968
      %v970 = vpop.f32.mrb[0].mxu0
      %v971 = vpop.f32.mrb[0].mxu0
      %v972 = vadd.f32 %v875, %v971
      %v973 = vpop.f32.mrb[0].mxu0
      %974 = vmatprep.mubr.bf16.mxu0 %v568
      %975 = vmatmul.mubr.bf16.gmra.mrb[0].mxu0 %v567
      %v976 = vpop.f32.mrb[0].mxu0
      %v977 = vadd.f32 %v880, %v976
      %v978 = vpop.f32.mrb[0].mxu0
      %v979 = vpop.f32.mrb[0].mxu0
      %v980 = vadd.f32 %v883, %v979
      %v981 = vpop.f32.mrb[0].mxu0
      %982 = vmatprep.mubr.bf16.mxu0 %v572
      %983 = vmatmul.mubr.bf16.gmra.mrb[0].mxu0 %v571
      %v984 = vpop.f32.mrb[0].mxu0
      %v985 = vadd.f32 %v888, %v984
      %v986 = vpop.f32.mrb[0].mxu0
      %v987 = vpop.f32.mrb[0].mxu0
      %v988 = vadd.f32 %v891, %v987
      %v989 = vpop.f32.mrb[0].mxu0
      %990 = vdwg.mxu0
      %v991 = vadd.f32 %v333, %v929
      %v992 = vadd.f32 %v334, %v932
      %v993 = vadd.f32 %v335, %v937
      %v994 = vadd.f32 %v336, %v940
      %v995 = vadd.f32 %v337, %v945
      %v996 = vadd.f32 %v338, %v948
      %v997 = vadd.f32 %v339, %v953
      %v998 = vadd.f32 %v340, %v956
      %v999 = vadd.f32 %v341, %v961
      %v1000 = vadd.f32 %v342, %v964
      %v1001 = vadd.f32 %v343, %v969
      %v1002 = vadd.f32 %v344, %v972
      %v1003 = vadd.f32 %v345, %v977
      %v1004 = vadd.f32 %v346, %v980
      %v1005 = vadd.f32 %v347, %v985
      %v1006 = vadd.f32 %v348, %v988
      %1007 = vst [vmem:[#allocation2] sm:$0xff] %v991
      %1008 = vst [vmem:[#allocation2 + $0x8] sm:$0xff] %v992
      %1009 = vst [vmem:[#allocation2 + $0x10] sm:$0xff] %v993
      %1010 = vst [vmem:[#allocation2 + $0x18] sm:$0xff] %v994
      %1011 = vst [vmem:[#allocation2 + $0x20] sm:$0xff] %v995
      %1012 = vst [vmem:[#allocation2 + $0x28] sm:$0xff] %v996
      %1013 = vst [vmem:[#allocation2 + $0x30] sm:$0xff] %v997
      %1014 = vst [vmem:[#allocation2 + $0x38] sm:$0xff] %v998
      %1015 = vst [vmem:[#allocation2 + $0x40] sm:$0xff] %v999
      %1016 = vst [vmem:[#allocation2 + $0x48] sm:$0xff] %v1000
      %1017 = vst [vmem:[#allocation2 + $0x50] sm:$0xff] %v1001
      %1018 = vst [vmem:[#allocation2 + $0x58] sm:$0xff] %v1002
      %1019 = vst [vmem:[#allocation2 + $0x60] sm:$0xff] %v1003
      %1020 = vst [vmem:[#allocation2 + $0x68] sm:$0xff] %v1004
      %1021 = vst [vmem:[#allocation2 + $0x70] sm:$0xff] %v1005
      %1022 = vst [vmem:[#allocation2 + $0x78] sm:$0xff] %v1006
      // Predicated region
      $region37: #{deconv_s2_tanh.1} parent=31 // pred_check
        %p1023 = pneg %p313
      $region38: #{deconv_s2_tanh.1} parent=31 // pred_check_branch
        %1025 = sbr.rel (%p1023) target = $region40
      $region39: #{deconv_s2_tanh.1} parent=31 // pred_region
        %v1026 = vld [vmem:[#allocation2] sm:$0xff]
        %v1027 = vld [vmem:[#allocation2 + $0x8] sm:$0xff]
        %v1028 = vld [vmem:[#allocation2 + $0x10] sm:$0xff]
        %v1029 = vld [vmem:[#allocation2 + $0x18] sm:$0xff]
        %v1030 = vld [vmem:[#allocation2 + $0x20] sm:$0xff]
        %v1031 = vld [vmem:[#allocation2 + $0x28] sm:$0xff]
        %v1032 = vld [vmem:[#allocation2 + $0x30] sm:$0xff]
        %v1033 = vld [vmem:[#allocation2 + $0x38] sm:$0xff]
        %v1034 = vld [vmem:[#allocation2 + $0x40] sm:$0xff]
        %v1035 = vld [vmem:[#allocation2 + $0x48] sm:$0xff]
        %v1036 = vld [vmem:[#allocation2 + $0x50] sm:$0xff]
        %v1037 = vld [vmem:[#allocation2 + $0x58] sm:$0xff]
        %v1038 = vld [vmem:[#allocation2 + $0x60] sm:$0xff]
        %v1039 = vld [vmem:[#allocation2 + $0x68] sm:$0xff]
        %v1040 = vld [vmem:[#allocation2 + $0x70] sm:$0xff]
        %v1041 = vld [vmem:[#allocation2 + $0x78] sm:$0xff]
        %v1042 = vld [vmem:[%s298] sm:$0x1]
        %v1044 = vlaneseq
        %v1045 = vshrl.u32 %v1044, 7
        %v1046 = vsub.s32 0, %v1045
        %v1047 = vrot.slane %v1042, %v1046
        %v1049 = vadd.f32 %v1026, %v1047
        %v1050 = vadd.f32 %v1027, %v1047
        %v1051 = vadd.f32 %v1028, %v1047
        %v1052 = vadd.f32 %v1029, %v1047
        %v1053 = vadd.f32 %v1030, %v1047
        %v1054 = vadd.f32 %v1031, %v1047
        %v1055 = vadd.f32 %v1032, %v1047
        %v1056 = vadd.f32 %v1033, %v1047
        %v1057 = vadd.f32 %v1034, %v1047
        %v1058 = vadd.f32 %v1035, %v1047
        %v1059 = vadd.f32 %v1036, %v1047
        %v1060 = vadd.f32 %v1037, %v1047
        %v1061 = vadd.f32 %v1038, %v1047
        %v1062 = vadd.f32 %v1039, %v1047
        %v1063 = vadd.f32 %v1040, %v1047
        %v1064 = vadd.f32 %v1041, %v1047
        %v1065 = vtanh.pop %v1049
        %v1066 = vtanh.pop %v1050
        %v1067 = vtanh.pop %v1051
        %v1068 = vtanh.pop %v1052
        %v1069 = vtanh.pop %v1053
        %v1070 = vtanh.pop %v1054
        %v1071 = vtanh.pop %v1055
        %v1072 = vtanh.pop %v1056
        %v1073 = vtanh.pop %v1057
        %v1074 = vtanh.pop %v1058
        %v1075 = vtanh.pop %v1059
        %v1076 = vtanh.pop %v1060
        %v1077 = vtanh.pop %v1061
        %v1078 = vtanh.pop %v1062
        %v1079 = vtanh.pop %v1063
        %v1080 = vtanh.pop %v1064
        %v1081 = vpack.c.bf16 %v1066, %v1065
        %v1082 = vpack.c.bf16 %v1068, %v1067
        %v1083 = vpack.c.bf16 %v1070, %v1069
        %v1084 = vpack.c.bf16 %v1072, %v1071
        %v1085 = vpack.c.bf16 %v1074, %v1073
        %v1086 = vpack.c.bf16 %v1076, %v1075
        %v1087 = vpack.c.bf16 %v1078, %v1077
        %v1088 = vpack.c.bf16 %v1080, %v1079
        %v1097 = vunpack.c.l.b16 %v1081
        %v1098 = vunpack.c.h.b16 %v1081
        %v1099 = vunpack.c.l.b16 %v1082
        %v1100 = vunpack.c.h.b16 %v1082
        %v1101 = vunpack.c.l.b16 %v1083
        %v1102 = vunpack.c.h.b16 %v1083
        %v1103 = vunpack.c.l.b16 %v1084
        %v1104 = vunpack.c.h.b16 %v1084
        %v1105 = vunpack.c.l.b16 %v1085
        %v1106 = vunpack.c.h.b16 %v1085
        %v1107 = vunpack.c.l.b16 %v1086
        %v1108 = vunpack.c.h.b16 %v1086
        %v1109 = vunpack.c.l.b16 %v1087
        %v1110 = vunpack.c.h.b16 %v1087
        %v1111 = vunpack.c.l.b16 %v1088
        %v1112 = vunpack.c.h.b16 %v1088
        %v1113 = vpack.c.b16 %v1097, %v1097
        %v1114 = vpack.c.b16 %v1098, %v1098
        %v1115 = vpack.c.b16 %v1099, %v1099
        %v1116 = vpack.c.b16 %v1100, %v1100
        %v1117 = vpack.c.b16 %v1101, %v1101
        %v1118 = vpack.c.b16 %v1102, %v1102
        %v1119 = vpack.c.b16 %v1103, %v1103
        %v1120 = vpack.c.b16 %v1104, %v1104
        %v1121 = vpack.c.b16 %v1105, %v1105
        %v1122 = vpack.c.b16 %v1106, %v1106
        %v1123 = vpack.c.b16 %v1107, %v1107
        %v1124 = vpack.c.b16 %v1108, %v1108
        %v1125 = vpack.c.b16 %v1109, %v1109
        %v1126 = vpack.c.b16 %v1110, %v1110
        %v1127 = vpack.c.b16 %v1111, %v1111
        %v1128 = vpack.c.b16 %v1112, %v1112
        %1145 = vst [vmem:[%s310] sm:$0xf] %v1113
        %1146 = vst [vmem:[%s310 + $0x4] sm:$0xf] %v1114
        %1147 = vst [vmem:[%s310 + $0x8] sm:$0xf] %v1115
        %1148 = vst [vmem:[%s310 + $0xc] sm:$0xf] %v1116
        %1149 = vst [vmem:[%s310 + $0x10] sm:$0xf] %v1117
        %1150 = vst [vmem:[%s310 + $0x14] sm:$0xf] %v1118
        %1151 = vst [vmem:[%s310 + $0x18] sm:$0xf] %v1119
        %1152 = vst [vmem:[%s310 + $0x1c] sm:$0xf] %v1120
        %1153 = vst [vmem:[%s310 + $0x20] sm:$0xf] %v1121
        %1154 = vst [vmem:[%s310 + $0x24] sm:$0xf] %v1122
        %1155 = vst [vmem:[%s310 + $0x28] sm:$0xf] %v1123
        %1156 = vst [vmem:[%s310 + $0x2c] sm:$0xf] %v1124
        %1157 = vst [vmem:[%s310 + $0x30] sm:$0xf] %v1125
        %1158 = vst [vmem:[%s310 + $0x34] sm:$0xf] %v1126
        %1159 = vst [vmem:[%s310 + $0x38] sm:$0xf] %v1127
        %1160 = vst [vmem:[%s310 + $0x3c] sm:$0xf] %v1128
      $region40: #{deconv_s2_tanh.1} parent=31 // pred_fallthru
        _
      %s1161 = smul.u32 16, %s21
      %p1162 = scmp.lt.s32.totalorder %s20, 3
      %s1163 = scalar_select %p1162, %s20, 3
      %p1164 = scmp.lt.s32.totalorder %s1161, 15
      %s1165 = scalar_select %p1164, %s1161, 15
      %p1166 = scmp.lt.s32.totalorder %s22, 0
      %s1167 = scalar_select %p1166, %s22, 0
      %s1168 = sadd.s32 %s1167, %s1165
      %s1169 = smul.addr %s1163, 16
      %s1170 = sadd.s32 %s1168, %s1169
      %s1171 = smul.addr %s1170, 4
      %s1172 = scalar_lea.vmem %s3, %s1171
      // Predicated region
      $region41: #{deconv_s2_tanh.1} parent=31 // pred_check
        %p1173 = pneg %p148
      $region42: #{deconv_s2_tanh.1} parent=31 // pred_check_branch
        %1175 = sbr.rel (%p1173) target = $region44
      $region43: #{deconv_s2_tanh.1} parent=31 // pred_region
        %s1176 = smul.u32 16, %s21
      $region44: #{deconv_s2_tanh.1} parent=31 // pred_fallthru
        _
    $region32: #{deconv_s2_tanh.1} parent=5 // pred_fallthru
      _
    %p1177 = scmp.le.s32.totalorder 2, %s9
    // Predicated region
    $region45: #{deconv_s2_tanh.1} parent=5 // pred_check
      %p1178 = pneg %p1177
    $region46: #{deconv_s2_tanh.1} parent=5 // pred_check_branch
      %1180 = sbr.rel (%p1178) target = $region48
    $region47: #{deconv_s2_tanh.1} parent=5 // pred_region
      %s1181 = ssub.s32 %s9, 2
      // Predicated region
      $region49: #{deconv_s2_tanh.1} parent=47 // pred_check
        %p1182 = pneg %p154
      $region50: #{deconv_s2_tanh.1} parent=47 // pred_check_branch
        %1184 = sbr.rel (%p1182) target = $region52
      $region51: #{deconv_s2_tanh.1} parent=47 // pred_region
        %s1185 = smul.u32 16, %s25
        %p1186 = scmp.lt.s32.totalorder %s24, 3
        %s1187 = scalar_select %p1186, %s24, 3
        %p1188 = scmp.lt.s32.totalorder %s1185, 15
        %s1189 = scalar_select %p1188, %s1185, 15
        %p1190 = scmp.lt.s32.totalorder %s26, 0
        %s1191 = scalar_select %p1190, %s26, 0
        %s1192 = sadd.s32 %s1191, %s1189
        %s1193 = smul.addr %s1187, 16
        %s1194 = sadd.s32 %s1192, %s1193
        %s1195 = smul.addr %s1194, 4
        %s1196 = scalar_lea.vmem %s3, %s1195
      $region52: #{deconv_s2_tanh.1} parent=47 // pred_fallthru
        _
    $region48: #{deconv_s2_tanh.1} parent=5 // pred_fallthru
      _
  $region6: #{deconv_s2_tanh.1} parent=0 // loop_footer
    %s13 = sadd.s32 1, %s9
  $region7: #{deconv_s2_tanh.1} parent=0 // loop_footer_branch
    %8 = sbr.rel target = $region3
  $region8: #{deconv_s2_tanh.1} parent=0 // loop_exit
    _

</llo_original>
